<compile_context>
chip_gen: v5e
topology: v5e:2x2
jax: 0.10.0
libtpu: 0.0.40
codegen_flags: <defaults>
</compile_context>

<pallas_src>
import math

import jax
import jax.numpy as jnp
import numpy as np
from jax.experimental import pallas as pl
from jax.experimental.pallas import tpu as pltpu

NEG_SLOPE = 0.01   # PyTorch nn.LeakyReLU default
BN_EPS = 1e-5      # PyTorch BatchNorm1d default

# Model dimensions (consistent with the module's constructor)
B = 8                      # demo batch
NUM_FEATURES = 32          # num_features
HID_AE = [16, 8]           # hidden_layers_autoencoder  -> latent dim = 8
COND_DIM = 2               # FilmLayerFactory.input_dim (dosage features)
FILM_HID = [4]             # FilmLayerFactory.hidden_layers
DEC_HID = HID_AE[::-1]     # [8, 16]

# ------------------------- packed-parameter layout ---------------------------
# One (112, 128) f32 slab.  Weight matrices at 8-aligned row offsets, biases
# one per row at the end.  Only the first `out_dim` lanes of each row are used.
SLAB_ROWS = 112
SLAB_COLS = 128

R_EW0 = 0      # (32, 16)  encoder Linear0 (BN folded)
R_EW1 = 32     # (16, 8)   encoder Linear1 (BN folded)
R_EW2 = 48     # (8, 8)    encoder output Linear
R_DW0 = 56     # (8, 8)    decoder Linear0
R_DW1 = 64     # (8, 16)   decoder Linear1
R_DW2 = 72     # (16, 32)  decoder output Linear
R_FWC = 88     # (2, 8)    merged FiLM conditioner weights  [f0wc | f1wc]
R_FGB = 96     # (8, 48)   block-diag merged gamma/beta heads
#                            rows 0:4, cols  0:16 -> [f0wg | f0wb]
#                            rows 4:8, cols 16:48 -> [f1wg | f1wb]
R_EB0 = 104    # (1, 16)
R_EB1 = 105    # (1, 8)
R_EB2 = 106    # (1, 8)
R_DB0 = 107    # (1, 8)
R_DB1 = 108    # (1, 16)
R_DB2 = 109    # (1, 32)
R_FBC = 110    # (1, 8)    merged FiLM conditioner bias  [f0bc | f1bc]
R_FGB_B = 111  # (1, 48)   merged gamma/beta bias [f0bg | f0bb | f1bg | f1bb]


def _lrelu(v):
    return jnp.where(v > 0, v, NEG_SLOPE * v)


# --------------------------------- kernel ------------------------------------
def _mtaae_kernel(x_ref, d_ref, p_ref, out_ref):
    def W(row, rows, cols):
        return p_ref[row:row + rows, 0:cols]

    def Bvec(row, cols):
        return p_ref[row:row + 1, 0:cols]

    def lin(v, wrow, k, n, brow):
        return jnp.dot(v, W(wrow, k, n),
                       preferred_element_type=jnp.float32) + Bvec(brow, n)

    # ---------------- encoder (NetworkBlock, eval; BN folded) ----------------
    h = x_ref[...]                                      # mask layer = identity (eval)
    h = _lrelu(lin(h, R_EW0, NUM_FEATURES, 16, R_EB0))  # Linear+BN -> LeakyReLU
    h = _lrelu(lin(h, R_EW1, 16, 8, R_EB1))
    z = _lrelu(lin(h, R_EW2, 8, 8, R_EB2))              # output layer + LeakyReLU

    # ---------------- FiLM generators (merged into 2 matmuls) ----------------
    d = d_ref[...]
    c = _lrelu(lin(d, R_FWC, COND_DIM, 8, R_FBC))       # (tb, 8)  = [c0 | c1]
    gb = _lrelu(lin(c, R_FGB, 8, 48, R_FGB_B))          # (tb, 48) = [g0|b0|g1|b1]

    # ---------------- decoder (NetworkBlockFilm) -----------------------------
    h = lin(z, R_DW0, 8, 8, R_DB0)
    h = _lrelu(gb[:, 0:8] * h + gb[:, 8:16])            # FiLM + hidden activation

    h = lin(h, R_DW1, 8, 16, R_DB1)
    h = _lrelu(gb[:, 16:32] * h + gb[:, 32:48])

    out_ref[...] = _lrelu(lin(h, R_DW2, 16, NUM_FEATURES, R_DB2))


# --------------------------------- wrapper -----------------------------------
def multi_task_aae_forward(x, dosages, slab, *, tile_b=128):
    """x: (B, NUM_FEATURES) f32; dosages: (B, COND_DIM) f32; slab: packed params."""
    b = x.shape[0]
    if b >= tile_b:
        tb = tile_b
    else:
        tb = max(8, -(-b // 8) * 8)          # round small batch up to a multiple of 8
    b_pad = -(-b // tb) * tb
    if b_pad != b:
        x = jnp.pad(x, ((0, b_pad - b), (0, 0)))
        dosages = jnp.pad(dosages, ((0, b_pad - b), (0, 0)))

    # rough cost hint for XLA's scheduler (MACs * 2)
    macs_per_row = (NUM_FEATURES * 16 + 16 * 8 + 8 * 8      # encoder
                    + 8 * 8 + 8 * 16 + 16 * NUM_FEATURES    # decoder
                    + COND_DIM * 8 + 8 * 48)                # merged FiLM
    cost = pl.CostEstimate(
        flops=2 * b_pad * macs_per_row,
        transcendentals=0,
        bytes_accessed=4 * (SLAB_ROWS * SLAB_COLS
                            + b_pad * (2 * NUM_FEATURES + COND_DIM)),
    )

    out = pl.pallas_call(
        _mtaae_kernel,
        grid=(b_pad // tb,),
        out_shape=jax.ShapeDtypeStruct((b_pad, NUM_FEATURES), jnp.float32),
        in_specs=[
            pl.BlockSpec((tb, NUM_FEATURES), lambda i: (i, 0)),
            pl.BlockSpec((tb, COND_DIM), lambda i: (i, 0)),
            # constant index_map: parameter slab stays resident across steps
            pl.BlockSpec((SLAB_ROWS, SLAB_COLS), lambda i: (0, 0)),
        ],
        out_specs=pl.BlockSpec((tb, NUM_FEATURES), lambda i: (i, 0)),
        compiler_params=pltpu.CompilerParams(dimension_semantics=("parallel",)),
        cost_estimate=cost,
    )(x, dosages, slab)
    return out[:b]


# ----------------------- deterministic parameter init -----------------------
def _xavier(key, fan_in, fan_out):
    bound = math.sqrt(6.0 / (fan_in + fan_out))
    return jax.random.uniform(key, (fan_in, fan_out), jnp.float32, -bound, bound)


def _bias(key, fan_in, fan_out):
    bound = 1.0 / math.sqrt(fan_in)
    return jax.random.uniform(key, (1, fan_out), jnp.float32, -bound, bound)


def init_params(key):
    ks = iter(jax.random.split(key, 64))
    p = {}

    def linear(name, fan_in, fan_out):
        p[name[0]] = _xavier(next(ks), fan_in, fan_out)
        p[name[1]] = _bias(next(ks), fan_in, fan_out)

    # encoder: 32 -> 16 -> 8, output Linear(8, 8); BN with default running
    # stats (mean=0, var=1) and affine (gamma=1, beta=0) as scale/shift.
    linear(("ew0", "eb0"), NUM_FEATURES, HID_AE[0])
    p["es0"] = jnp.full((1, HID_AE[0]), 1.0 / math.sqrt(1.0 + BN_EPS), jnp.float32)
    p["et0"] = jnp.zeros((1, HID_AE[0]), jnp.float32)
    linear(("ew1", "eb1"), HID_AE[0], HID_AE[1])
    p["es1"] = jnp.full((1, HID_AE[1]), 1.0 / math.sqrt(1.0 + BN_EPS), jnp.float32)
    p["et1"] = jnp.zeros((1, HID_AE[1]), jnp.float32)
    linear(("ew2", "eb2"), HID_AE[1], HID_AE[1])

    # decoder linears: 8 -> 8 -> 16, output Linear(16, 32)
    linear(("dw0", "db0"), DEC_HID[0], DEC_HID[0])
    linear(("dw1", "db1"), DEC_HID[0], DEC_HID[1])
    linear(("dw2", "db2"), DEC_HID[1], NUM_FEATURES)

    # FiLM generator for decoder hidden layer 0 (output dim = 8)
    linear(("f0wc", "f0bc"), COND_DIM, FILM_HID[-1])
    linear(("f0wg", "f0bg"), FILM_HID[-1], DEC_HID[0])
    linear(("f0wb", "f0bb"), FILM_HID[-1], DEC_HID[0])

    # FiLM generator for decoder hidden layer 1 (output dim = 16)
    linear(("f1wc", "f1bc"), COND_DIM, FILM_HID[-1])
    linear(("f1wg", "f1bg"), FILM_HID[-1], DEC_HID[1])
    linear(("f1wb", "f1bb"), FILM_HID[-1], DEC_HID[1])

    return p


def pack_params(p):
    """Fold BN into the encoder Linears, merge FiLM matmuls, and pack into a
    single (112, 128) f32 slab.  When loading a trained PyTorch checkpoint the
    fold must use the checkpoint's running_mean/running_var, not defaults."""
    # BN fold: y = (xW + b)*s + t  ==  x(W*s) + (b*s + t)
    ew0 = p["ew0"] * p["es0"]
    eb0 = p["eb0"] * p["es0"] + p["et0"]
    ew1 = p["ew1"] * p["es1"]
    eb1 = p["eb1"] * p["es1"] + p["et1"]

    # Merged FiLM conditioner: [c0 | c1] from one dot.
    fwc = jnp.concatenate([p["f0wc"], p["f1wc"]], axis=1)          # (2, 8)
    fbc = jnp.concatenate([p["f0bc"], p["f1bc"]], axis=1)          # (1, 8)

    # Block-diagonal merged gamma/beta heads: [g0|b0|g1|b1] from one dot.
    fgb = jnp.zeros((8, 48), jnp.float32)
    fgb = fgb.at[0:4, 0:16].set(jnp.concatenate([p["f0wg"], p["f0wb"]], axis=1))
    fgb = fgb.at[4:8, 16:48].set(jnp.concatenate([p["f1wg"], p["f1wb"]], axis=1))
    fgb_b = jnp.concatenate([p["f0bg"], p["f0bb"], p["f1bg"], p["f1bb"]], axis=1)

    slab = jnp.zeros((SLAB_ROWS, SLAB_COLS), jnp.float32)

    def put(s, row, mat):
        r, c = mat.shape
        return s.at[row:row + r, 0:c].set(mat)

    for row, mat in [
        (R_EW0, ew0), (R_EW1, ew1), (R_EW2, p["ew2"]),
        (R_DW0, p["dw0"]), (R_DW1, p["dw1"]), (R_DW2, p["dw2"]),
        (R_FWC, fwc), (R_FGB, fgb),
        (R_EB0, eb0), (R_EB1, eb1), (R_EB2, p["eb2"]),
        (R_DB0, p["db0"]), (R_DB1, p["db1"]), (R_DB2, p["db2"]),
        (R_FBC, fbc), (R_FGB_B, fgb_b),
    ]:
        slab = put(slab, row, mat)
    return slab


# ----------------------- pure-JAX reference (for checking) ------------------
def reference_forward(x, d, p):
    def lin(v, w, b):
        return v @ w + b

    h = x
    h = _lrelu(lin(h, p["ew0"], p["eb0"]) * p["es0"] + p["et0"])
    h = _lrelu(lin(h, p["ew1"], p["eb1"]) * p["es1"] + p["et1"])
    z = _lrelu(lin(h, p["ew2"], p["eb2"]))

    h = lin(z, p["dw0"], p["db0"])
    c = _lrelu(lin(d, p["f0wc"], p["f0bc"]))
    g = _lrelu(lin(c, p["f0wg"], p["f0bg"]))
    bta = _lrelu(lin(c, p["f0wb"], p["f0bb"]))
    h = _lrelu(g * h + bta)

    h = lin(h, p["dw1"], p["db1"])
    c = _lrelu(lin(d, p["f1wc"], p["f1bc"]))
    g = _lrelu(lin(c, p["f1wg"], p["f1bg"]))
    bta = _lrelu(lin(c, p["f1wb"], p["f1bb"]))
    h = _lrelu(g * h + bta)

    return _lrelu(lin(h, p["dw2"], p["db2"]))


if __name__ == "__main__":
    key = jax.random.PRNGKey(0)
    kx, kd, kp = jax.random.split(key, 3)
    x = jax.random.normal(kx, (B, NUM_FEATURES), jnp.float32)
    dosages = jax.random.uniform(kd, (B, COND_DIM), jnp.float32)
    params = init_params(kp)
    slab = pack_params(params)

    out = multi_task_aae_forward(x, dosages, slab)
    out = jax.block_until_ready(out)

    assert out.shape == (B, NUM_FEATURES), out.shape
    ref = reference_forward(x, dosages, params)
    np.testing.assert_allclose(np.asarray(out), np.asarray(ref), rtol=2e-2, atol=2e-2)

    print("KERNEL_OK")
</pallas_src>

<mosaic_0001>
module attributes {stable_mosaic.version = 11 : i64} {
  func.func @_mtaae_kernel(%arg0: i32, %arg1: memref<8x32xf32, #tpu.memory_space<vmem>>, %arg2: memref<8x2xf32, #tpu.memory_space<vmem>>, %arg3: memref<112x128xf32, #tpu.memory_space<vmem>>, %arg4: memref<8x32xf32, #tpu.memory_space<vmem>>) attributes {dimension_semantics = [#tpu.dimension_semantics<parallel>], iteration_bounds = array<i64: 1>, scalar_prefetch = 0 : i64, scratch_operands = 0 : i64, tpu.core_type = #tpu.core_type<tc>, window_params = [{transform_indices = @transform_0, window_bounds = array<i64: 8, 32>}, {transform_indices = @transform_1, window_bounds = array<i64: 8, 2>}, {pipeline_mode = #tpu.pipeline_mode<synchronous>, transform_indices = @transform_2, window_bounds = array<i64: 112, 128>}, {transform_indices = @transform_3, window_bounds = array<i64: 8, 32>}]} {
    %c0 = arith.constant 0 : index
    %c0_0 = arith.constant 0 : index
    %0 = vector.load %arg1[%c0, %c0_0] : memref<8x32xf32, #tpu.memory_space<vmem>>, vector<8x32xf32>
    %c0_1 = arith.constant 0 : index
    %c0_2 = arith.constant 0 : index
    %1 = vector.load %arg3[%c0_1, %c0_2] : memref<112x128xf32, #tpu.memory_space<vmem>>, vector<32x16xf32>
    %cst = arith.constant dense<0.000000e+00> : vector<8x16xf32>
    %2 = tpu.matmul %0, %1, %cst {dimension_numbers = #tpu.dot_dimension_numbers<[1], [0], [0], [1], [0, 0, 1, 1], [], []>} : vector<8x32xf32>, vector<32x16xf32>, vector<8x16xf32> -> vector<8x16xf32>
    %c104 = arith.constant 104 : index
    %c0_3 = arith.constant 0 : index
    %3 = vector.load %arg3[%c104, %c0_3] : memref<112x128xf32, #tpu.memory_space<vmem>>, vector<1x16xf32>
    %4 = vector.broadcast %3 : vector<1x16xf32> to vector<8x16xf32>
    %5 = arith.addf %2, %4 : vector<8x16xf32>
    %cst_4 = arith.constant 0.000000e+00 : f32
    %6 = vector.broadcast %cst_4 : f32 to vector<8x16xf32>
    %7 = arith.cmpf ogt, %5, %6 : vector<8x16xf32>
    %cst_5 = arith.constant 0.00999999977 : f32
    %8 = vector.broadcast %cst_5 : f32 to vector<8x16xf32>
    %9 = arith.mulf %8, %5 : vector<8x16xf32>
    %10 = arith.select %7, %5, %9 : vector<8x16xi1>, vector<8x16xf32>
    %c32 = arith.constant 32 : index
    %c0_6 = arith.constant 0 : index
    %11 = vector.load %arg3[%c32, %c0_6] : memref<112x128xf32, #tpu.memory_space<vmem>>, vector<16x8xf32>
    %cst_7 = arith.constant dense<0.000000e+00> : vector<8x8xf32>
    %12 = tpu.matmul %10, %11, %cst_7 {dimension_numbers = #tpu.dot_dimension_numbers<[1], [0], [0], [1], [0, 0, 1, 1], [], []>} : vector<8x16xf32>, vector<16x8xf32>, vector<8x8xf32> -> vector<8x8xf32>
    %c105 = arith.constant 105 : index
    %c0_8 = arith.constant 0 : index
    %13 = vector.load %arg3[%c105, %c0_8] : memref<112x128xf32, #tpu.memory_space<vmem>>, vector<1x8xf32>
    %14 = vector.broadcast %13 : vector<1x8xf32> to vector<8x8xf32>
    %15 = arith.addf %12, %14 : vector<8x8xf32>
    %cst_9 = arith.constant 0.000000e+00 : f32
    %16 = vector.broadcast %cst_9 : f32 to vector<8x8xf32>
    %17 = arith.cmpf ogt, %15, %16 : vector<8x8xf32>
    %cst_10 = arith.constant 0.00999999977 : f32
    %18 = vector.broadcast %cst_10 : f32 to vector<8x8xf32>
    %19 = arith.mulf %18, %15 : vector<8x8xf32>
    %20 = arith.select %17, %15, %19 : vector<8x8xi1>, vector<8x8xf32>
    %c48 = arith.constant 48 : index
    %c0_11 = arith.constant 0 : index
    %21 = vector.load %arg3[%c48, %c0_11] : memref<112x128xf32, #tpu.memory_space<vmem>>, vector<8x8xf32>
    %cst_12 = arith.constant dense<0.000000e+00> : vector<8x8xf32>
    %22 = tpu.matmul %20, %21, %cst_12 {dimension_numbers = #tpu.dot_dimension_numbers<[1], [0], [0], [1], [0, 0, 1, 1], [], []>} : vector<8x8xf32>, vector<8x8xf32>, vector<8x8xf32> -> vector<8x8xf32>
    %c106 = arith.constant 106 : index
    %c0_13 = arith.constant 0 : index
    %23 = vector.load %arg3[%c106, %c0_13] : memref<112x128xf32, #tpu.memory_space<vmem>>, vector<1x8xf32>
    %24 = vector.broadcast %23 : vector<1x8xf32> to vector<8x8xf32>
    %25 = arith.addf %22, %24 : vector<8x8xf32>
    %cst_14 = arith.constant 0.000000e+00 : f32
    %26 = vector.broadcast %cst_14 : f32 to vector<8x8xf32>
    %27 = arith.cmpf ogt, %25, %26 : vector<8x8xf32>
    %cst_15 = arith.constant 0.00999999977 : f32
    %28 = vector.broadcast %cst_15 : f32 to vector<8x8xf32>
    %29 = arith.mulf %28, %25 : vector<8x8xf32>
    %30 = arith.select %27, %25, %29 : vector<8x8xi1>, vector<8x8xf32>
    %c0_16 = arith.constant 0 : index
    %c0_17 = arith.constant 0 : index
    %31 = vector.load %arg2[%c0_16, %c0_17] : memref<8x2xf32, #tpu.memory_space<vmem>>, vector<8x2xf32>
    %c88 = arith.constant 88 : index
    %c0_18 = arith.constant 0 : index
    %32 = vector.load %arg3[%c88, %c0_18] : memref<112x128xf32, #tpu.memory_space<vmem>>, vector<2x8xf32>
    %cst_19 = arith.constant dense<0.000000e+00> : vector<8x8xf32>
    %33 = tpu.matmul %31, %32, %cst_19 {dimension_numbers = #tpu.dot_dimension_numbers<[1], [0], [0], [1], [0, 0, 1, 1], [], []>} : vector<8x2xf32>, vector<2x8xf32>, vector<8x8xf32> -> vector<8x8xf32>
    %c110 = arith.constant 110 : index
    %c0_20 = arith.constant 0 : index
    %34 = vector.load %arg3[%c110, %c0_20] : memref<112x128xf32, #tpu.memory_space<vmem>>, vector<1x8xf32>
    %35 = vector.broadcast %34 : vector<1x8xf32> to vector<8x8xf32>
    %36 = arith.addf %33, %35 : vector<8x8xf32>
    %cst_21 = arith.constant 0.000000e+00 : f32
    %37 = vector.broadcast %cst_21 : f32 to vector<8x8xf32>
    %38 = arith.cmpf ogt, %36, %37 : vector<8x8xf32>
    %cst_22 = arith.constant 0.00999999977 : f32
    %39 = vector.broadcast %cst_22 : f32 to vector<8x8xf32>
    %40 = arith.mulf %39, %36 : vector<8x8xf32>
    %41 = arith.select %38, %36, %40 : vector<8x8xi1>, vector<8x8xf32>
    %c96 = arith.constant 96 : index
    %c0_23 = arith.constant 0 : index
    %42 = vector.load %arg3[%c96, %c0_23] : memref<112x128xf32, #tpu.memory_space<vmem>>, vector<8x48xf32>
    %cst_24 = arith.constant dense<0.000000e+00> : vector<8x48xf32>
    %43 = tpu.matmul %41, %42, %cst_24 {dimension_numbers = #tpu.dot_dimension_numbers<[1], [0], [0], [1], [0, 0, 1, 1], [], []>} : vector<8x8xf32>, vector<8x48xf32>, vector<8x48xf32> -> vector<8x48xf32>
    %c111 = arith.constant 111 : index
    %c0_25 = arith.constant 0 : index
    %44 = vector.load %arg3[%c111, %c0_25] : memref<112x128xf32, #tpu.memory_space<vmem>>, vector<1x48xf32>
    %45 = vector.broadcast %44 : vector<1x48xf32> to vector<8x48xf32>
    %46 = arith.addf %43, %45 : vector<8x48xf32>
    %cst_26 = arith.constant 0.000000e+00 : f32
    %47 = vector.broadcast %cst_26 : f32 to vector<8x48xf32>
    %48 = arith.cmpf ogt, %46, %47 : vector<8x48xf32>
    %cst_27 = arith.constant 0.00999999977 : f32
    %49 = vector.broadcast %cst_27 : f32 to vector<8x48xf32>
    %50 = arith.mulf %49, %46 : vector<8x48xf32>
    %51 = arith.select %48, %46, %50 : vector<8x48xi1>, vector<8x48xf32>
    %c56 = arith.constant 56 : index
    %c0_28 = arith.constant 0 : index
    %52 = vector.load %arg3[%c56, %c0_28] : memref<112x128xf32, #tpu.memory_space<vmem>>, vector<8x8xf32>
    %cst_29 = arith.constant dense<0.000000e+00> : vector<8x8xf32>
    %53 = tpu.matmul %30, %52, %cst_29 {dimension_numbers = #tpu.dot_dimension_numbers<[1], [0], [0], [1], [0, 0, 1, 1], [], []>} : vector<8x8xf32>, vector<8x8xf32>, vector<8x8xf32> -> vector<8x8xf32>
    %c107 = arith.constant 107 : index
    %c0_30 = arith.constant 0 : index
    %54 = vector.load %arg3[%c107, %c0_30] : memref<112x128xf32, #tpu.memory_space<vmem>>, vector<1x8xf32>
    %55 = vector.broadcast %54 : vector<1x8xf32> to vector<8x8xf32>
    %56 = arith.addf %53, %55 : vector<8x8xf32>
    %57 = vector.extract_strided_slice %51 {offsets = [0, 0], sizes = [8, 8], strides = [1, 1]} : vector<8x48xf32> to vector<8x8xf32>
    %58 = arith.mulf %57, %56 : vector<8x8xf32>
    %59 = vector.extract_strided_slice %51 {offsets = [0, 8], sizes = [8, 8], strides = [1, 1]} : vector<8x48xf32> to vector<8x8xf32>
    %60 = arith.addf %58, %59 : vector<8x8xf32>
    %cst_31 = arith.constant 0.000000e+00 : f32
    %61 = vector.broadcast %cst_31 : f32 to vector<8x8xf32>
    %62 = arith.cmpf ogt, %60, %61 : vector<8x8xf32>
    %cst_32 = arith.constant 0.00999999977 : f32
    %63 = vector.broadcast %cst_32 : f32 to vector<8x8xf32>
    %64 = arith.mulf %63, %60 : vector<8x8xf32>
    %65 = arith.select %62, %60, %64 : vector<8x8xi1>, vector<8x8xf32>
    %c64 = arith.constant 64 : index
    %c0_33 = arith.constant 0 : index
    %66 = vector.load %arg3[%c64, %c0_33] : memref<112x128xf32, #tpu.memory_space<vmem>>, vector<8x16xf32>
    %cst_34 = arith.constant dense<0.000000e+00> : vector<8x16xf32>
    %67 = tpu.matmul %65, %66, %cst_34 {dimension_numbers = #tpu.dot_dimension_numbers<[1], [0], [0], [1], [0, 0, 1, 1], [], []>} : vector<8x8xf32>, vector<8x16xf32>, vector<8x16xf32> -> vector<8x16xf32>
    %c108 = arith.constant 108 : index
    %c0_35 = arith.constant 0 : index
    %68 = vector.load %arg3[%c108, %c0_35] : memref<112x128xf32, #tpu.memory_space<vmem>>, vector<1x16xf32>
    %69 = vector.broadcast %68 : vector<1x16xf32> to vector<8x16xf32>
    %70 = arith.addf %67, %69 : vector<8x16xf32>
    %71 = vector.extract_strided_slice %51 {offsets = [0, 16], sizes = [8, 16], strides = [1, 1]} : vector<8x48xf32> to vector<8x16xf32>
    %72 = arith.mulf %71, %70 : vector<8x16xf32>
    %73 = vector.extract_strided_slice %51 {offsets = [0, 32], sizes = [8, 16], strides = [1, 1]} : vector<8x48xf32> to vector<8x16xf32>
    %74 = arith.addf %72, %73 : vector<8x16xf32>
    %cst_36 = arith.constant 0.000000e+00 : f32
    %75 = vector.broadcast %cst_36 : f32 to vector<8x16xf32>
    %76 = arith.cmpf ogt, %74, %75 : vector<8x16xf32>
    %cst_37 = arith.constant 0.00999999977 : f32
    %77 = vector.broadcast %cst_37 : f32 to vector<8x16xf32>
    %78 = arith.mulf %77, %74 : vector<8x16xf32>
    %79 = arith.select %76, %74, %78 : vector<8x16xi1>, vector<8x16xf32>
    %c72 = arith.constant 72 : index
    %c0_38 = arith.constant 0 : index
    %80 = vector.load %arg3[%c72, %c0_38] : memref<112x128xf32, #tpu.memory_space<vmem>>, vector<16x32xf32>
    %cst_39 = arith.constant dense<0.000000e+00> : vector<8x32xf32>
    %81 = tpu.matmul %79, %80, %cst_39 {dimension_numbers = #tpu.dot_dimension_numbers<[1], [0], [0], [1], [0, 0, 1, 1], [], []>} : vector<8x16xf32>, vector<16x32xf32>, vector<8x32xf32> -> vector<8x32xf32>
    %c109 = arith.constant 109 : index
    %c0_40 = arith.constant 0 : index
    %82 = vector.load %arg3[%c109, %c0_40] : memref<112x128xf32, #tpu.memory_space<vmem>>, vector<1x32xf32>
    %83 = vector.broadcast %82 : vector<1x32xf32> to vector<8x32xf32>
    %84 = arith.addf %81, %83 : vector<8x32xf32>
    %cst_41 = arith.constant 0.000000e+00 : f32
    %85 = vector.broadcast %cst_41 : f32 to vector<8x32xf32>
    %86 = arith.cmpf ogt, %84, %85 : vector<8x32xf32>
    %cst_42 = arith.constant 0.00999999977 : f32
    %87 = vector.broadcast %cst_42 : f32 to vector<8x32xf32>
    %88 = arith.mulf %87, %84 : vector<8x32xf32>
    %89 = arith.select %86, %84, %88 : vector<8x32xi1>, vector<8x32xf32>
    %c0_43 = arith.constant 0 : index
    %c0_44 = arith.constant 0 : index
    %90 = vector.load %arg4[%c0_43, %c0_44] : memref<8x32xf32, #tpu.memory_space<vmem>>, vector<8x32xf32>
    tpu.vector_store %arg4[%c0_43, %c0_44], %89 {strides = array<i32>} : memref<8x32xf32, #tpu.memory_space<vmem>>, vector<8x32xf32>,
    return
  }
  func.func @transform_0(%arg0: i32) -> (i32, i32) {
    %c0_i32 = arith.constant 0 : i32
    %c0_i32_0 = arith.constant 0 : i32
    return %arg0, %c0_i32 : i32, i32
  }
  func.func @transform_1(%arg0: i32) -> (i32, i32) {
    %c0_i32 = arith.constant 0 : i32
    %c0_i32_0 = arith.constant 0 : i32
    return %arg0, %c0_i32 : i32, i32
  }
  func.func @transform_2(%arg0: i32) -> (i32, i32) {
    %c0_i32 = arith.constant 0 : i32
    %c0_i32_0 = arith.constant 0 : i32
    %c0_i32_1 = arith.constant 0 : i32
    return %c0_i32, %c0_i32_0 : i32, i32
  }
  func.func @transform_3(%arg0: i32) -> (i32, i32) {
    %c0_i32 = arith.constant 0 : i32
    %c0_i32_0 = arith.constant 0 : i32
    return %arg0, %c0_i32 : i32, i32
  }
}

</mosaic_0001>

<llo_original>
// kernel: tpu_custom_call.1
$region0: #{tpu_custom_call.1}
  #allocation0 [shape = 'u32[]', space=smem, size = 0x4, offset = 0x4, fixed_abs, tag = 'smem constant byte address 0x4 - core index']
  #allocation1 [shape = 'u32[72,128]{1,0:T(1,128)}', space=vmem, size = 0x9000, scoped, tag = 'internal scratch']
  %s0 = inlined_call_operand.vmem [shape: f32[8,32], index: 0, kind: input, shape index: {}]
  %s1 = inlined_call_operand.vmem [shape: f32[8,2], index: 1, kind: input, shape index: {}]
  %s2 = inlined_call_operand.hbm [shape: f32[112,128], index: 2, kind: input, shape index: {}]
  %s3 = inlined_call_operand.hbm [shape: f32[8,32], index: 3, kind: output, shape index: {}]
  %s4 = sld [smem:[#allocation0]]
  $region26: #{tpu_custom_call.1} parent=0
    _
  %s6 = ssub.s32 1, %s4
  %s7 = scalar_select 0, %s6, %s4
  $region1: #{tpu_custom_call.1} parent=0
    #allocation2 [shape = 'u8[57344]{0}', space=vmem, size = 0xe000, scoped, tag = 'input window, operand 2, single buffered']
    #allocation3 [shape = 's32[1]{0}', space=sflag, size = 0x4, scoped, tag = 'scoped memory for tpu_custom_call.1']
    #allocation4 [shape = 's32[1]{0}', space=sflag, size = 0x4, scoped, tag = 'scoped memory for tpu_custom_call.1']
    #allocation5 [shape = 'u8[4096]{0}', space=vmem, size = 0x1000, scoped, tag = 'output window, operand 0, single buffered']
    %8 = vsyncpa [#allocation3], 0
    %9 = vsyncpa [#allocation4], 0
    // Predicated region
    $region2: #{tpu_custom_call.1} parent=1 // pred_check
      _
    $region3: #{tpu_custom_call.1} parent=1 // pred_check_branch
      %11 = sbr.rel (0) target = $region5
    $region4: #{tpu_custom_call.1} parent=1 // pred_region
      _
    $region5: #{tpu_custom_call.1} parent=1 // pred_fallthru
      _
    // Predicated region
    $region6: #{tpu_custom_call.1} parent=1 // pred_check
      _
    $region7: #{tpu_custom_call.1} parent=1 // pred_check_branch
      %13 = sbr.rel (0) target = $region9
    $region8: #{tpu_custom_call.1} parent=1 // pred_region
      _
    $region9: #{tpu_custom_call.1} parent=1 // pred_fallthru
      _
    // Predicated region
    $region10: #{tpu_custom_call.1} parent=1 // pred_check
      _
    $region11: #{tpu_custom_call.1} parent=1 // pred_check_branch
      %15 = sbr.rel (0) target = $region13
    $region12: #{tpu_custom_call.1} parent=1 // pred_region
      %17 = vsyncadd [#allocation3], 0
      %s18 = sshll.u32 %s2, 4
      %s19 = int_to_ptr.hbm [resolvable:$true] %s18
      %s20 = sshll.u32 [#allocation2], 4
      %s21 = int_to_ptr.vmem [resolvable:$true] %s20
      %26 = dma.hbm_to_vmem [thread:$0]  %s19, 1792, %s21, [#allocation3], 128, 128, 8
    $region13: #{tpu_custom_call.1} parent=1 // pred_fallthru
      _
    // Predicated region
    $region14: #{tpu_custom_call.1} parent=1 // pred_check
      _
    $region15: #{tpu_custom_call.1} parent=1 // pred_check_branch
      %28 = sbr.rel (0) target = $region17
    $region16: #{tpu_custom_call.1} parent=1 // pred_region
      %30 = dma.done [#allocation3], 1792
    $region17: #{tpu_custom_call.1} parent=1 // pred_fallthru
      _
    %v31 = vld [vmem:[%s0] sm:$0xff]
    %v32 = vld [vmem:[#allocation2] sm:$0xff]
    %v33 = vld [vmem:[#allocation2 + $0x8] sm:$0xff]
    %v34 = vld [vmem:[#allocation2 + $0x10] sm:$0xff]
    %v35 = vld [vmem:[#allocation2 + $0x18] sm:$0xff]
    %v36 = vld [vmem:[#allocation2 + $0x68] sm:$0x1]
    %v37 = vperm.slane %v36, 0
    %vm38 = vcmask 261120
    %v40 = vsel %vm38, %v31, 0
    %42 = vmatpush.msra.mxu0 0.0
    %43 = vmatpush.msra.mxu0 0.0
    %44 = vmatpush.msra.mxu0 0.0
    %45 = vmatpush.msra.mxu0 0.0
    %46 = vmatpush.msra.mxu0 0.0
    %47 = vmatpush.msra.mxu0 0.0
    %48 = vmatpush.msra.mxu0 0.0
    %49 = vmatpush.msra.mxu0 0.0
    %50 = vmatpush.msra.mxu0 0.0
    %51 = vmatpush.msra.mxu0 0.0
    %52 = vmatpush.msra.mxu0 0.0
    %53 = vmatpush.msra.mxu0 0.0
    %54 = vmatpush.msra.mxu0 %v35
    %55 = vmatpush.msra.mxu0 %v34
    %56 = vmatpush.msra.mxu0 %v33
    %57 = vmatpush.msra.mxu0 %v32
    %58 = vmatmul.f32.gmra.mxu0 %v40
    %v59 = vpop.f32.mrf.mxu0
    %v60 = vadd.f32 %v37, %v59
    %61 = vdwg.mxu0
    %vm62 = vcmp.gt.f32.partialorder %v60, 0.0
    %v63 = vmul.f32 %v60, 0.01
    %v64 = vsel %vm62, %v60, %v63
    %v65 = vld [vmem:[#allocation2 + $0x20] sm:$0xff]
    %v66 = vld [vmem:[#allocation2 + $0x28] sm:$0xff]
    %v67 = vld [vmem:[#allocation2 + $0x69] sm:$0x1]
    %v68 = vperm.slane %v67, 0
    %vm69 = vcmask 130048
    %v71 = vsel %vm69, %v64, 0
    %73 = vmatpush.msra.mxu0 0.0
    %74 = vmatpush.msra.mxu0 0.0
    %75 = vmatpush.msra.mxu0 0.0
    %76 = vmatpush.msra.mxu0 0.0
    %77 = vmatpush.msra.mxu0 0.0
    %78 = vmatpush.msra.mxu0 0.0
    %79 = vmatpush.msra.mxu0 0.0
    %80 = vmatpush.msra.mxu0 0.0
    %81 = vmatpush.msra.mxu0 0.0
    %82 = vmatpush.msra.mxu0 0.0
    %83 = vmatpush.msra.mxu0 0.0
    %84 = vmatpush.msra.mxu0 0.0
    %85 = vmatpush.msra.mxu0 0.0
    %86 = vmatpush.msra.mxu0 0.0
    %87 = vmatpush.msra.mxu0 %v66
    %88 = vmatpush.msra.mxu0 %v65
    %89 = vmatmul.f32.gmra.mxu0 %v71
    %v90 = vpop.f32.mrf.mxu0
    %v91 = vadd.f32 %v68, %v90
    %92 = vdwg.mxu0
    %vm93 = vcmp.gt.f32.partialorder %v91, 0.0
    %v94 = vmul.f32 %v91, 0.01
    %v95 = vsel %vm93, %v91, %v94
    %v96 = vld [vmem:[#allocation2 + $0x30] sm:$0xff]
    %v97 = vld [vmem:[#allocation2 + $0x6a] sm:$0x1]
    %v98 = vperm.slane %v97, 0
    %vm99 = vcmask 64512
    %v101 = vsel %vm99, %v95, 0
    %103 = vmatpush.msra.mxu0 0.0
    %104 = vmatpush.msra.mxu0 0.0
    %105 = vmatpush.msra.mxu0 0.0
    %106 = vmatpush.msra.mxu0 0.0
    %107 = vmatpush.msra.mxu0 0.0
    %108 = vmatpush.msra.mxu0 0.0
    %109 = vmatpush.msra.mxu0 0.0
    %110 = vmatpush.msra.mxu0 0.0
    %111 = vmatpush.msra.mxu0 0.0
    %112 = vmatpush.msra.mxu0 0.0
    %113 = vmatpush.msra.mxu0 0.0
    %114 = vmatpush.msra.mxu0 0.0
    %115 = vmatpush.msra.mxu0 0.0
    %116 = vmatpush.msra.mxu0 0.0
    %117 = vmatpush.msra.mxu0 0.0
    %118 = vmatpush.msra.mxu0 %v96
    %119 = vmatmul.f32.gmra.mxu0 %v101
    %v120 = vpop.f32.mrf.mxu0
    %v121 = vadd.f32 %v98, %v120
    %122 = vdwg.mxu0
    %vm123 = vcmp.gt.f32.partialorder %v121, 0.0
    %v124 = vmul.f32 %v121, 0.01
    %v125 = vsel %vm123, %v121, %v124
    %v126 = vld [vmem:[%s1] sm:$0xff]
    %v127 = vld [vmem:[#allocation2 + $0x58] sm:$0x3]
    %v128 = vld [vmem:[#allocation2 + $0x6e] sm:$0x1]
    %v129 = vperm.slane %v128, 0
    %vm130 = vcmask 15360
    %v132 = vsel %vm130, %v126, 0
    %vm134 = vcmask 1041408
    %v136 = vsel %vm134, %v127, 0
    %138 = vmatpush.msra.mxu0 0.0
    %139 = vmatpush.msra.mxu0 0.0
    %140 = vmatpush.msra.mxu0 0.0
    %141 = vmatpush.msra.mxu0 0.0
    %142 = vmatpush.msra.mxu0 0.0
    %143 = vmatpush.msra.mxu0 0.0
    %144 = vmatpush.msra.mxu0 0.0
    %145 = vmatpush.msra.mxu0 0.0
    %146 = vmatpush.msra.mxu0 0.0
    %147 = vmatpush.msra.mxu0 0.0
    %148 = vmatpush.msra.mxu0 0.0
    %149 = vmatpush.msra.mxu0 0.0
    %150 = vmatpush.msra.mxu0 0.0
    %151 = vmatpush.msra.mxu0 0.0
    %152 = vmatpush.msra.mxu0 0.0
    %153 = vmatpush.msra.mxu0 %v136
    %154 = vmatmul.f32.gmra.mxu0 %v132
    %v155 = vpop.f32.mrf.mxu0
    %v156 = vadd.f32 %v129, %v155
    %157 = vdwg.mxu0
    %vm158 = vcmp.gt.f32.partialorder %v156, 0.0
    %v159 = vmul.f32 %v156, 0.01
    %v160 = vsel %vm158, %v156, %v159
    %v161 = vld [vmem:[#allocation2 + $0x60] sm:$0xff]
    %v162 = vld [vmem:[#allocation2 + $0x6f] sm:$0x1]
    %v163 = vperm.slane %v162, 0
    %v165 = vsel %vm99, %v160, 0
    %167 = vmatpush.msra.mxu0 0.0
    %168 = vmatpush.msra.mxu0 0.0
    %169 = vmatpush.msra.mxu0 0.0
    %170 = vmatpush.msra.mxu0 0.0
    %171 = vmatpush.msra.mxu0 0.0
    %172 = vmatpush.msra.mxu0 0.0
    %173 = vmatpush.msra.mxu0 0.0
    %174 = vmatpush.msra.mxu0 0.0
    %175 = vmatpush.msra.mxu0 0.0
    %176 = vmatpush.msra.mxu0 0.0
    %177 = vmatpush.msra.mxu0 0.0
    %178 = vmatpush.msra.mxu0 0.0
    %179 = vmatpush.msra.mxu0 0.0
    %180 = vmatpush.msra.mxu0 0.0
    %181 = vmatpush.msra.mxu0 0.0
    %182 = vmatpush.msra.mxu0 %v161
    %183 = vmatmul.f32.gmra.mxu0 %v165
    %v184 = vpop.f32.mrf.mxu0
    %v185 = vadd.f32 %v163, %v184
    %186 = vdwg.mxu0
    %vm187 = vcmp.gt.f32.partialorder %v185, 0.0
    %v188 = vmul.f32 %v185, 0.01
    %v189 = vsel %vm187, %v185, %v188
    %v190 = vld [vmem:[#allocation2 + $0x38] sm:$0xff]
    %v191 = vld [vmem:[#allocation2 + $0x6b] sm:$0x1]
    %v192 = vperm.slane %v191, 0
    %v194 = vsel %vm99, %v125, 0
    %196 = vmatpush.msra.mxu0 0.0
    %197 = vmatpush.msra.mxu0 0.0
    %198 = vmatpush.msra.mxu0 0.0
    %199 = vmatpush.msra.mxu0 0.0
    %200 = vmatpush.msra.mxu0 0.0
    %201 = vmatpush.msra.mxu0 0.0
    %202 = vmatpush.msra.mxu0 0.0
    %203 = vmatpush.msra.mxu0 0.0
    %204 = vmatpush.msra.mxu0 0.0
    %205 = vmatpush.msra.mxu0 0.0
    %206 = vmatpush.msra.mxu0 0.0
    %207 = vmatpush.msra.mxu0 0.0
    %208 = vmatpush.msra.mxu0 0.0
    %209 = vmatpush.msra.mxu0 0.0
    %210 = vmatpush.msra.mxu0 0.0
    %211 = vmatpush.msra.mxu0 %v190
    %212 = vmatmul.f32.gmra.mxu0 %v194
    %v213 = vpop.f32.mrf.mxu0
    %v214 = vadd.f32 %v192, %v213
    %215 = vdwg.mxu0
    %v216 = vmul.f32 %v189, %v214
    %218 = vrot.lane.b32.xlu0 %v189, 120
    %v219 = vpop.permute.xlu0 %218
    %v221 = vadd.f32 %v216, %v219
    %vm222 = vcmp.gt.f32.partialorder %v221, 0.0
    %v223 = vmul.f32 %v221, 0.01
    %v224 = vsel %vm222, %v221, %v223
    %v225 = vld [vmem:[#allocation2 + $0x40] sm:$0xff]
    %v226 = vld [vmem:[#allocation2 + $0x6c] sm:$0x1]
    %v227 = vperm.slane %v226, 0
    %v229 = vsel %vm99, %v224, 0
    %231 = vmatpush.msra.mxu0 0.0
    %232 = vmatpush.msra.mxu0 0.0
    %233 = vmatpush.msra.mxu0 0.0
    %234 = vmatpush.msra.mxu0 0.0
    %235 = vmatpush.msra.mxu0 0.0
    %236 = vmatpush.msra.mxu0 0.0
    %237 = vmatpush.msra.mxu0 0.0
    %238 = vmatpush.msra.mxu0 0.0
    %239 = vmatpush.msra.mxu0 0.0
    %240 = vmatpush.msra.mxu0 0.0
    %241 = vmatpush.msra.mxu0 0.0
    %242 = vmatpush.msra.mxu0 0.0
    %243 = vmatpush.msra.mxu0 0.0
    %244 = vmatpush.msra.mxu0 0.0
    %245 = vmatpush.msra.mxu0 0.0
    %246 = vmatpush.msra.mxu0 %v225
    %247 = vmatmul.f32.gmra.mxu0 %v229
    %v248 = vpop.f32.mrf.mxu0
    %v249 = vadd.f32 %v227, %v248
    %250 = vdwg.mxu0
    %252 = vrot.lane.b32.xlu0 %v249, 16
    %v253 = vpop.permute.xlu0 %252
    %v255 = vmul.f32 %v189, %v253
    %256 = vrot.lane.b32.xlu0 %v189, 112
    %v257 = vpop.permute.xlu0 %256
    %v259 = vadd.f32 %v255, %v257
    %vm260 = vcmp.gt.f32.partialorder %v259, 0.0
    %v261 = vmul.f32 %v259, 0.01
    %v262 = vsel %vm260, %v259, %v261
    %v263 = vld [vmem:[#allocation2 + $0x48] sm:$0xff]
    %v264 = vld [vmem:[#allocation2 + $0x50] sm:$0xff]
    %v265 = vld [vmem:[#allocation2 + $0x6d] sm:$0x1]
    %v266 = vperm.slane %v265, 0
    %268 = vrot.lane.b32.xlu0 %v262, 112
    %v269 = vpop.permute.xlu0 %268
    %v270 = vsel %vm69, %v269, 0
    %272 = vmatpush.msra.mxu0 0.0
    %273 = vmatpush.msra.mxu0 0.0
    %274 = vmatpush.msra.mxu0 0.0
    %275 = vmatpush.msra.mxu0 0.0
    %276 = vmatpush.msra.mxu0 0.0
    %277 = vmatpush.msra.mxu0 0.0
    %278 = vmatpush.msra.mxu0 0.0
    %279 = vmatpush.msra.mxu0 0.0
    %280 = vmatpush.msra.mxu0 0.0
    %281 = vmatpush.msra.mxu0 0.0
    %282 = vmatpush.msra.mxu0 0.0
    %283 = vmatpush.msra.mxu0 0.0
    %284 = vmatpush.msra.mxu0 0.0
    %285 = vmatpush.msra.mxu0 0.0
    %286 = vmatpush.msra.mxu0 %v264
    %287 = vmatpush.msra.mxu0 %v263
    %288 = vmatmul.f32.gmra.mxu0 %v270
    %v289 = vpop.f32.mrf.mxu0
    %v290 = vadd.f32 %v266, %v289
    %291 = vdwg.mxu0
    %vm292 = vcmp.gt.f32.partialorder %v290, 0.0
    %v293 = vmul.f32 %v290, 0.01
    %v294 = vsel %vm292, %v290, %v293
    %295 = vst.msk [vmem:[#allocation5] sm:$0xff] %vm38, %v294
    // Predicated region
    $region18: #{tpu_custom_call.1} parent=1 // pred_check
      _
    $region19: #{tpu_custom_call.1} parent=1 // pred_check_branch
      %297 = sbr.rel (0) target = $region21
    $region20: #{tpu_custom_call.1} parent=1 // pred_region
      %299 = vsyncadd [#allocation4], 0
      %s301 = sshll.u32 [#allocation5], 4
      %s302 = int_to_ptr.vmem [resolvable:$true] %s301
      %s303 = sshll.u32 %s3, 4
      %s304 = int_to_ptr.hbm [resolvable:$true] %s303
      %306 = dma.vmem_to_hbm [thread:$0]  %s302, 128, %s304, [#allocation4]
    $region21: #{tpu_custom_call.1} parent=1 // pred_fallthru
      _
    // Predicated region
    $region22: #{tpu_custom_call.1} parent=1 // pred_check
      _
    $region23: #{tpu_custom_call.1} parent=1 // pred_check_branch
      %308 = sbr.rel (0) target = $region25
    $region24: #{tpu_custom_call.1} parent=1 // pred_region
      %310 = dma.done [#allocation4], 128
    $region25: #{tpu_custom_call.1} parent=1 // pred_fallthru
      _
    %311 = vsyncpa [#allocation3], 1
    %312 = vsyncpa [#allocation4], 1

</llo_original>
